<compile_context>
chip_gen: v7x
topology: tpu7x:2x2x1
jax: 0.10.0
libtpu: 0.0.40
codegen_flags: <defaults>
</compile_context>

<pallas_src>
import functools

import jax
import jax.numpy as jnp
from jax import lax
from jax.experimental import pallas as pl
from jax.experimental.pallas import tpu as pltpu


# --------------------------------------------------------------------------- #
# Fast path: one batch-slab per grid step, 1 read + 1 write of x.
# --------------------------------------------------------------------------- #
def _channel_gate_kernel(x_ref, w1t_ref, b1_ref, w2t_ref, b2_ref, o_ref, *, inv_hw):
    x = x_ref[...]                                   # (Bt, C, HW), input dtype
    bt = x.shape[0]

    # Global avg/max pools over the spatial (lane) axis, accumulated in f32
    # without materializing an f32 copy of the tile.  When HW % 128 != 0 the
    # trailing partial vreg is masked by Mosaic (logical-shape semantics).
    s = jnp.sum(x, axis=2, dtype=jnp.float32)        # (Bt, C)
    mx = jnp.max(x, axis=2).astype(jnp.float32)      # (Bt, C)
    avg = s * inv_hw

    # Stack avg/max pools -> one operand, one matmul per MLP layer.
    pooled = jnp.concatenate([avg, mx], axis=0)      # (2*Bt, C) f32

    h = jnp.dot(pooled, w1t_ref[...], preferred_element_type=jnp.float32) + b1_ref[...]
    h = jnp.maximum(h, 0.0)
    att = jnp.dot(h, w2t_ref[...], preferred_element_type=jnp.float32) + b2_ref[...]

    scale = jax.nn.sigmoid(att[:bt] + att[bt:]).astype(x.dtype)   # (Bt, C)
    # Broadcast-multiply in the input dtype (bf16-native on v6e/v7x VPUs).
    o_ref[...] = (x * scale[:, :, None]).astype(o_ref.dtype)


# --------------------------------------------------------------------------- #
# Fallback path kernels (per-batch slab too large for one VMEM tile).
# --------------------------------------------------------------------------- #
def _pool_kernel(x_ref, sum_ref, max_ref, *, hw_valid, hw_chunk):
    j = pl.program_id(1)
    x = x_ref[...]                                   # (1, C, hw_chunk)
    if hw_valid % hw_chunk != 0:
        # Only the last chunk overruns the array; mask out-of-range lanes.
        lane = lax.broadcasted_iota(jnp.int32, x.shape, 2) + j * hw_chunk
        valid = lane < hw_valid
        xs = jnp.where(valid, x, jnp.zeros((), x.dtype))
        xm = jnp.where(valid, x, jnp.array(-jnp.inf, x.dtype))
    else:
        xs, xm = x, x
    s = jnp.sum(xs, axis=2, dtype=jnp.float32).reshape(1, 1, -1)   # (1, 1, C)
    m = jnp.max(xm, axis=2).astype(jnp.float32).reshape(1, 1, -1)  # (1, 1, C)

    @pl.when(j == 0)
    def _():
        sum_ref[...] = s
        max_ref[...] = m

    @pl.when(j != 0)
    def _():
        sum_ref[...] = sum_ref[...] + s
        max_ref[...] = jnp.maximum(max_ref[...], m)


def _scale_kernel(x_ref, scale_ref, o_ref):
    x = x_ref[...]                                   # (1, C, hw_chunk)
    s = jnp.transpose(scale_ref[...], (0, 2, 1))     # (1, 1, C) -> (1, C, 1)
    o_ref[...] = (x * s.astype(x.dtype)).astype(o_ref.dtype)


# --------------------------------------------------------------------------- #
# Wrapper
# --------------------------------------------------------------------------- #
def _vmem_capacity_bytes():
    try:
        return int(pltpu.get_tpu_info().vmem_capacity_bytes)
    except Exception:
        return 64 * 1024 * 1024   # conservative (v7x-sized) default


def _divisors(n):
    return [d for d in range(1, n + 1) if n % d == 0]


def channel_gate(x, w1, b1, w2, b2, *, block_b=None, tile_budget_bytes=None,
                 vmem_limit_bytes=None):
    """CBAM ChannelGate forward (pool_types=['avg','max']).

    x: (B, C, H, W) float NCHW.  w1: (hidden, C), b1: (hidden,),
    w2: (C, hidden), b2: (C,)   (PyTorch nn.Linear layouts).
    """
    # TODO(synk): only the default pool_types=['avg','max'] are implemented
    # ('lp'/'lse' branches of the PyTorch module are not translated).
    if not jnp.issubdtype(x.dtype, jnp.floating):
        raise ValueError("channel_gate expects a floating-point input")

    B, C, H, W = x.shape
    hidden = w1.shape[0]
    HW = H * W
    itemsize = jnp.dtype(x.dtype).itemsize

    # Generation-aware VMEM policy.
    vmem_cap = _vmem_capacity_bytes()
    small_vmem = vmem_cap < 100 * 1024 * 1024        # v7x-class: 64 MiB per TC
    if tile_budget_bytes is None:
        tile_budget_bytes = (6 if small_vmem else 14) * 1024 * 1024
    if vmem_limit_bytes is None:
        vmem_limit_bytes = (40 if small_vmem else 72) * 1024 * 1024

    x_flat = x.reshape(B, C, HW)                     # layout-preserving, no copy

    # Weight layouts so both MLP layers are plain row-major matmuls on the
    # stacked (2*Bt, C) pooled operand.
    w1t = jnp.asarray(w1, jnp.float32).T             # (C, hidden)
    b1r = jnp.asarray(b1, jnp.float32).reshape(1, hidden)
    w2t = jnp.asarray(w2, jnp.float32).T             # (hidden, C)
    b2r = jnp.asarray(b2, jnp.float32).reshape(1, C)

    per_elem = C * HW * itemsize

    if block_b is None:
        fits = [d for d in _divisors(B) if d * per_elem <= tile_budget_bytes]
        if fits:
            if small_vmem and B >= 2:
                # 2 TensorCores: want >=2 grid steps, ideally an even count so
                # both cores get equal work on this BW-bound kernel.
                even = [d for d in fits if (B // d) >= 2 and (B // d) % 2 == 0]
                multi = [d for d in fits if (B // d) >= 2]
                block_b = max(even or multi or fits)
            else:
                block_b = max(fits)                  # single TC: fewest, biggest steps
        # else: leave None -> two-pass fallback below.

    if block_b is not None:
        block_b = int(block_b)
        if B % block_b != 0:
            raise ValueError("block_b must divide the batch size")
        kernel = functools.partial(_channel_gate_kernel, inv_hw=1.0 / HW)
        out_flat = pl.pallas_call(
            kernel,
            out_shape=jax.ShapeDtypeStruct((B, C, HW), x.dtype),
            grid_spec=pltpu.PrefetchScalarGridSpec(
                num_scalar_prefetch=0,
                grid=(B // block_b,),
                in_specs=[
                    pl.BlockSpec((block_b, C, HW), lambda b: (b, 0, 0)),  # x slab
                    pl.BlockSpec((C, hidden), lambda b: (0, 0)),          # w1^T
                    pl.BlockSpec((1, hidden), lambda b: (0, 0)),          # b1 row
                    pl.BlockSpec((hidden, C), lambda b: (0, 0)),          # w2^T
                    pl.BlockSpec((1, C), lambda b: (0, 0)),               # b2 row
                ],
                out_specs=pl.BlockSpec((block_b, C, HW), lambda b: (b, 0, 0)),
            ),
            compiler_params=pltpu.CompilerParams(
                dimension_semantics=("parallel",),
                vmem_limit_bytes=vmem_limit_bytes,
            ),
        )(x_flat, w1t, b1r, w2t, b2r)
        return out_flat.reshape(B, C, H, W)

    # ----------------------------------------------------------------------- #
    # Fallback: one batch element exceeds the per-tile VMEM budget.
    # Pass 1: HW-chunked pooling (accumulator block resident across the
    #         'arbitrary' HW axis).  Tiny (B, C) MLP runs in plain JAX.
    # Pass 2: HW-chunked elementwise scale multiply.
    # ----------------------------------------------------------------------- #
    hw_chunk = (tile_budget_bytes // (C * itemsize)) // 128 * 128
    hw_chunk = max(hw_chunk, 128)
    hw_chunk = min(hw_chunk, pl.cdiv(HW, 128) * 128)
    # TODO(synk): if C alone is so large that C*128*itemsize exceeds the tile
    # budget, the channel axis would also need tiling; not implemented.
    n_chunks = pl.cdiv(HW, hw_chunk)

    pool_kernel = functools.partial(_pool_kernel, hw_valid=HW, hw_chunk=hw_chunk)
    sum_p, max_p = pl.pallas_call(
        pool_kernel,
        out_shape=(jax.ShapeDtypeStruct((B, 1, C), jnp.float32),
                   jax.ShapeDtypeStruct((B, 1, C), jnp.float32)),
        grid_spec=pltpu.PrefetchScalarGridSpec(
            num_scalar_prefetch=0,
            grid=(B, n_chunks),
            in_specs=[pl.BlockSpec((1, C, hw_chunk), lambda i, j: (i, 0, j))],
            out_specs=[pl.BlockSpec((1, 1, C), lambda i, j: (i, 0, 0)),
                       pl.BlockSpec((1, 1, C), lambda i, j: (i, 0, 0))],
        ),
        compiler_params=pltpu.CompilerParams(
            dimension_semantics=("parallel", "arbitrary"),
            vmem_limit_bytes=vmem_limit_bytes,
        ),
    )(x_flat)

    avg_p = sum_p.reshape(B, C) * (1.0 / HW)
    max_p = max_p.reshape(B, C)
    pooled = jnp.concatenate([avg_p, max_p], axis=0)            # (2B, C) f32
    h = jnp.maximum(pooled @ w1t + b1r, 0.0)
    att = h @ w2t + b2r                                          # (2B, C)
    scale = jax.nn.sigmoid(att[:B] + att[B:]).reshape(B, 1, C)   # f32

    out_flat = pl.pallas_call(
        _scale_kernel,
        out_shape=jax.ShapeDtypeStruct((B, C, HW), x.dtype),
        grid_spec=pltpu.PrefetchScalarGridSpec(
            num_scalar_prefetch=0,
            grid=(B, n_chunks),
            in_specs=[pl.BlockSpec((1, C, hw_chunk), lambda i, j: (i, 0, j)),
                      pl.BlockSpec((1, 1, C), lambda i, j: (i, 0, 0))],
            out_specs=pl.BlockSpec((1, C, hw_chunk), lambda i, j: (i, 0, j)),
        ),
        compiler_params=pltpu.CompilerParams(
            dimension_semantics=("parallel", "parallel"),
            vmem_limit_bytes=vmem_limit_bytes,
        ),
    )(x_flat, scale)
    return out_flat.reshape(B, C, H, W)


def channel_gate_ref(x, w1, b1, w2, b2):
    """Pure-JAX reference mirroring the PyTorch forward (pool_types=['avg','max'])."""
    B, C, H, W = x.shape
    xf = x.reshape(B, C, H * W).astype(jnp.float32)
    avg_pool = jnp.mean(xf, axis=2)   # (B, C)
    max_pool = jnp.max(xf, axis=2)    # (B, C)

    def mlp(p):  # p: (B, C)
        h = jnp.maximum(p @ w1.T + b1, 0.0)
        return h @ w2.T + b2

    att = mlp(avg_pool) + mlp(max_pool)               # (B, C)
    scale = jax.nn.sigmoid(att)[:, :, None, None]     # (B, C, 1, 1)
    return (x.astype(jnp.float32) * scale).astype(x.dtype)


if __name__ == "__main__":
    # Module shapes: gate_channels=32, reduction_ratio=4 -> hidden=8
    C = 32
    hidden = C // 4

    key = jax.random.PRNGKey(0)
    k1, k2, k3, k4, kx1, kx2, kx3 = jax.random.split(key, 7)

    bound1 = 1.0 / (C ** 0.5)
    w1 = jax.random.uniform(k1, (hidden, C), minval=-bound1, maxval=bound1, dtype=jnp.float32)
    b1 = jax.random.uniform(k2, (hidden,), minval=-bound1, maxval=bound1, dtype=jnp.float32)
    bound2 = 1.0 / (hidden ** 0.5)
    w2 = jax.random.uniform(k3, (C, hidden), minval=-bound2, maxval=bound2, dtype=jnp.float32)
    b2 = jax.random.uniform(k4, (C,), minval=-bound2, maxval=bound2, dtype=jnp.float32)

    def check(x, **kw):
        out = jax.block_until_ready(channel_gate(x, w1, b1, w2, b2, **kw))
        ref = channel_gate_ref(x, w1, b1, w2, b2)
        assert out.shape == x.shape
        assert jnp.allclose(out, ref, atol=1e-4, rtol=1e-4), "mismatch vs reference"

    # 1) Main path, 128-aligned spatial (HW = 256).
    x_a = jax.random.normal(kx1, (2, C, 16, 16), dtype=jnp.float32)
    check(x_a)

    # 2) Main path, non-128-aligned spatial (HW = 196): full-extent block, no pad.
    x_b = jax.random.normal(kx2, (2, C, 14, 14), dtype=jnp.float32)
    check(x_b)

    # 3) Forced two-pass fallback (tiny tile budget) with a ragged last HW chunk.
    check(x_b, tile_budget_bytes=16 * 1024)

    # 4) Main path with a batch size whose only divisors are {1, 3}.
    x_c = jax.random.normal(kx3, (3, C, 16, 16), dtype=jnp.float32)
    check(x_c)

    print("KERNEL_OK")
</pallas_src>

<mosaic_0001>
module attributes {stable_mosaic.version = 11 : i64} {
  func.func @_channel_gate_kernel(%arg0: i32, %arg1: memref<1x32x256xf32, #tpu.memory_space<vmem>>, %arg2: memref<32x8xf32, #tpu.memory_space<vmem>>, %arg3: memref<1x8xf32, #tpu.memory_space<vmem>>, %arg4: memref<8x32xf32, #tpu.memory_space<vmem>>, %arg5: memref<1x32xf32, #tpu.memory_space<vmem>>, %arg6: memref<1x32x256xf32, #tpu.memory_space<vmem>>) attributes {dimension_semantics = [#tpu.dimension_semantics<parallel>], iteration_bounds = array<i64: 2>, scalar_prefetch = 0 : i64, scratch_operands = 0 : i64, tpu.core_type = #tpu.core_type<tc>, window_params = [{transform_indices = @transform_0, window_bounds = array<i64: 1, 32, 256>}, {pipeline_mode = #tpu.pipeline_mode<synchronous>, transform_indices = @transform_1, window_bounds = array<i64: 32, 8>}, {pipeline_mode = #tpu.pipeline_mode<synchronous>, transform_indices = @transform_2, window_bounds = array<i64: 1, 8>}, {pipeline_mode = #tpu.pipeline_mode<synchronous>, transform_indices = @transform_3, window_bounds = array<i64: 8, 32>}, {pipeline_mode = #tpu.pipeline_mode<synchronous>, transform_indices = @transform_4, window_bounds = array<i64: 1, 32>}, {transform_indices = @transform_5, window_bounds = array<i64: 1, 32, 256>}]} {
    %c0 = arith.constant 0 : index
    %c0_0 = arith.constant 0 : index
    %c0_1 = arith.constant 0 : index
    %0 = vector.load %arg1[%c0, %c0_0, %c0_1] : memref<1x32x256xf32, #tpu.memory_space<vmem>>, vector<1x32x256xf32>
    %cst = arith.constant dense<0.000000e+00> : vector<1x32xf32>
    %1 = vector.multi_reduction <add>, %0, %cst [2] : vector<1x32x256xf32> to vector<1x32xf32>
    %cst_2 = arith.constant dense<0xFF800000> : vector<1x32xf32>
    %2 = vector.multi_reduction <maximumf>, %0, %cst_2 [2] : vector<1x32x256xf32> to vector<1x32xf32>
    %cst_3 = arith.constant 3.906250e-03 : f32
    %3 = vector.broadcast %cst_3 : f32 to vector<1x32xf32>
    %4 = arith.mulf %1, %3 : vector<1x32xf32>
    %5 = tpu.concatenate %4, %2 in 0 : vector<1x32xf32>, vector<1x32xf32> -> vector<2x32xf32>
    %c0_4 = arith.constant 0 : index
    %c0_5 = arith.constant 0 : index
    %6 = vector.load %arg2[%c0_4, %c0_5] : memref<32x8xf32, #tpu.memory_space<vmem>>, vector<32x8xf32>
    %cst_6 = arith.constant dense<0.000000e+00> : vector<2x8xf32>
    %7 = tpu.matmul %5, %6, %cst_6 {dimension_numbers = #tpu.dot_dimension_numbers<[1], [0], [0], [1], [0, 0, 1, 1], [], []>} : vector<2x32xf32>, vector<32x8xf32>, vector<2x8xf32> -> vector<2x8xf32>
    %c0_7 = arith.constant 0 : index
    %c0_8 = arith.constant 0 : index
    %8 = vector.load %arg3[%c0_7, %c0_8] : memref<1x8xf32, #tpu.memory_space<vmem>>, vector<1x8xf32>
    %9 = vector.broadcast %8 : vector<1x8xf32> to vector<2x8xf32>
    %10 = arith.addf %7, %9 : vector<2x8xf32>
    %cst_9 = arith.constant 0.000000e+00 : f32
    %11 = vector.broadcast %cst_9 : f32 to vector<2x8xf32>
    %12 = arith.maximumf %10, %11 : vector<2x8xf32>
    %c0_10 = arith.constant 0 : index
    %c0_11 = arith.constant 0 : index
    %13 = vector.load %arg4[%c0_10, %c0_11] : memref<8x32xf32, #tpu.memory_space<vmem>>, vector<8x32xf32>
    %cst_12 = arith.constant dense<0.000000e+00> : vector<2x32xf32>
    %14 = tpu.matmul %12, %13, %cst_12 {dimension_numbers = #tpu.dot_dimension_numbers<[1], [0], [0], [1], [0, 0, 1, 1], [], []>} : vector<2x8xf32>, vector<8x32xf32>, vector<2x32xf32> -> vector<2x32xf32>
    %c0_13 = arith.constant 0 : index
    %c0_14 = arith.constant 0 : index
    %15 = vector.load %arg5[%c0_13, %c0_14] : memref<1x32xf32, #tpu.memory_space<vmem>>, vector<1x32xf32>
    %16 = vector.broadcast %15 : vector<1x32xf32> to vector<2x32xf32>
    %17 = arith.addf %14, %16 : vector<2x32xf32>
    %18 = vector.extract_strided_slice %17 {offsets = [0, 0], sizes = [1, 32], strides = [1, 1]} : vector<2x32xf32> to vector<1x32xf32>
    %19 = vector.extract_strided_slice %17 {offsets = [1, 0], sizes = [1, 32], strides = [1, 1]} : vector<2x32xf32> to vector<1x32xf32>
    %20 = arith.addf %18, %19 : vector<1x32xf32>
    %21 = arith.negf %20 : vector<1x32xf32>
    %22 = math.exp %21 : vector<1x32xf32>
    %cst_15 = arith.constant 1.000000e+00 : f32
    %23 = vector.broadcast %cst_15 : f32 to vector<1x32xf32>
    %24 = arith.addf %23, %22 : vector<1x32xf32>
    %25 = arith.divf %23, %24 : vector<1x32xf32>
    %26 = vector.shape_cast %25 : vector<1x32xf32> to vector<1x32x1xf32>
    %27 = vector.broadcast %26 : vector<1x32x1xf32> to vector<1x32x256xf32>
    %28 = arith.mulf %0, %27 : vector<1x32x256xf32>
    %c0_16 = arith.constant 0 : index
    %c0_17 = arith.constant 0 : index
    %c0_18 = arith.constant 0 : index
    %29 = vector.load %arg6[%c0_16, %c0_17, %c0_18] : memref<1x32x256xf32, #tpu.memory_space<vmem>>, vector<1x32x256xf32>
    tpu.vector_store %arg6[%c0_16, %c0_17, %c0_18], %28 {strides = array<i32>} : memref<1x32x256xf32, #tpu.memory_space<vmem>>, vector<1x32x256xf32>,
    return
  }
  func.func @transform_0(%arg0: i32) -> (i32, i32, i32) {
    %c0_i32 = arith.constant 0 : i32
    %c0_i32_0 = arith.constant 0 : i32
    %c0_i32_1 = arith.constant 0 : i32
    return %arg0, %c0_i32, %c0_i32_0 : i32, i32, i32
  }
  func.func @transform_1(%arg0: i32) -> (i32, i32) {
    %c0_i32 = arith.constant 0 : i32
    %c0_i32_0 = arith.constant 0 : i32
    %c0_i32_1 = arith.constant 0 : i32
    return %c0_i32, %c0_i32_0 : i32, i32
  }
  func.func @transform_2(%arg0: i32) -> (i32, i32) {
    %c0_i32 = arith.constant 0 : i32
    %c0_i32_0 = arith.constant 0 : i32
    %c0_i32_1 = arith.constant 0 : i32
    return %c0_i32, %c0_i32_0 : i32, i32
  }
  func.func @transform_3(%arg0: i32) -> (i32, i32) {
    %c0_i32 = arith.constant 0 : i32
    %c0_i32_0 = arith.constant 0 : i32
    %c0_i32_1 = arith.constant 0 : i32
    return %c0_i32, %c0_i32_0 : i32, i32
  }
  func.func @transform_4(%arg0: i32) -> (i32, i32) {
    %c0_i32 = arith.constant 0 : i32
    %c0_i32_0 = arith.constant 0 : i32
    %c0_i32_1 = arith.constant 0 : i32
    return %c0_i32, %c0_i32_0 : i32, i32
  }
  func.func @transform_5(%arg0: i32) -> (i32, i32, i32) {
    %c0_i32 = arith.constant 0 : i32
    %c0_i32_0 = arith.constant 0 : i32
    %c0_i32_1 = arith.constant 0 : i32
    return %arg0, %c0_i32, %c0_i32_0 : i32, i32, i32
  }
}

</mosaic_0001>

<llo_original>
// kernel: tpu_custom_call.1
$region0: #{tpu_custom_call.1}
  #allocation0 [shape = 'u32[]', space=smem, size = 0x4, offset = 0x4, fixed_abs, tag = 'smem constant byte address 0x4 - core index']
  #allocation1 [shape = 'u32[144,128]{1,0:T(1,128)}', space=vmem, size = 0x12000, scoped, tag = 'internal scratch']
  %s0 = inlined_call_operand.hbm [shape: f32[2,32,256], index: 0, kind: input, shape index: {}]
  %s1 = inlined_call_operand.vmem [shape: f32[32,8], index: 1, kind: input, shape index: {}]
  %s2 = inlined_call_operand.vmem [shape: f32[1,8], index: 2, kind: input, shape index: {}]
  %s3 = inlined_call_operand.vmem [shape: f32[8,32], index: 3, kind: input, shape index: {}]
  %s4 = inlined_call_operand.vmem [shape: f32[1,32], index: 4, kind: input, shape index: {}]
  %s5 = inlined_call_operand.hbm [shape: f32[2,32,256], index: 5, kind: output, shape index: {}]
  %s6 = sld [smem:[#allocation0]]
  $region57: #{tpu_custom_call.1} parent=0
    _
  %s8 = ssub.s32 1, %s6
  %s9 = scalar_select 0, %s8, %s6
  $region1: #{tpu_custom_call.1} parent=0
    #allocation2 [shape = 'u8[65536]{0}', space=vmem, size = 0x10000, scoped, tag = 'input window, operand 0']
    #allocation3 [shape = 's32[2]{0}', space=sflag, size = 0x8, scoped, tag = 'scoped memory for tpu_custom_call.1']
    #allocation4 [shape = 's32[2]{0}', space=sflag, size = 0x8, scoped, tag = 'scoped memory for tpu_custom_call.1']
    #allocation5 [shape = 'u8[65536]{0}', space=vmem, size = 0x10000, scoped, tag = 'output window, operand 0']
    %10 = vsyncpa [#allocation3], 0
    %s11 = scalar_lea.sflag [#allocation3], 1
    %12 = vsyncpa %s11, 0
    %13 = vsyncpa [#allocation4], 0
    %s14 = scalar_lea.sflag [#allocation4], 1
    %15 = vsyncpa %s14, 0
    loop: start=0, step=1, limit=4
    $region2: #{tpu_custom_call.1} parent=1 // loop_pre_header
      _
    $region3: #{tpu_custom_call.1} parent=1 // loop_header
      %s17 = sphi 0, %s21
      %p18 = scmp.ge.s32.totalorder %s17, 4
      %s27 = sphi 0, %s29
      %s30 = sphi 0, %s27
      %s31 = sphi 0, %s30
      %s47 = sphi 0, %s31
      %s51 = sphi 0, %s51
      %s53 = sphi 0, %s51
      %s54 = sphi 0, %s53
      %s68 = sphi 0, %s54
      %s72 = sphi 0, %s72
      %s74 = sphi 0, %s72
      %s75 = sphi 0, %s74
      %s89 = sphi 0, %s75
      %s93 = sphi 0, %s93
      %s95 = sphi 0, %s93
      %s96 = sphi 0, %s95
      %s110 = sphi 0, %s96
      %s114 = sphi 0, %s114
      %s116 = sphi 0, %s114
      %s117 = sphi 0, %s116
      %s131 = sphi 0, %s117
      %s137 = sphi 0, %s139
      %s140 = sphi 0, %s137
      %s141 = sphi 0, %s140
      %s157 = sphi 0, %s141
    $region4: #{tpu_custom_call.1} parent=1 // loop_header_branch
      %20 = sbr.rel (%p18) target = $region8
    $region5: #{tpu_custom_call.1} parent=1 // loop_body
      %s22 = ssub.s32 %s17, 1
      %s23 = ssub.s32 %s17, 2
      %s24 = sadd.s32 %s17, 1
      %s25 = ssub.s32 %s17, %s24
      %p26 = scmp.eq.s32.totalorder %s25, 0
      %s28 = sadd.s32 %s27, 1
      %s29 = scalar_select %p26, %s27, %s28
      %p32 = pneg %p26
      %p33 = scmp.eq.s32.totalorder %s17, 1
      %p34 = por %p32, %p33
      %p35 = scmp.ne.s32.totalorder %s27, %s30
      %p36 = scmp.eq.s32.totalorder %s17, 0
      %p37 = por %p35, %p36
      %p38 = scmp.ne.s32.totalorder %s27, %s30
      %p39 = scmp.eq.s32.totalorder %s22, 1
      %p40 = por %p38, %p39
      %p41 = scmp.ne.s32.totalorder %s30, %s31
      %p42 = scmp.eq.s32.totalorder %s22, 0
      %p43 = por %p41, %p42
      %p44 = scmp.ne.s32.totalorder %s30, %s31
      %p45 = scmp.eq.s32.totalorder %s23, 1
      %p46 = por %p44, %p45
      %p48 = scmp.ne.s32.totalorder %s31, %s47
      %p49 = scmp.eq.s32.totalorder %s23, 0
      %p50 = por %p48, %p49
      %s52 = sadd.s32 %s51, 1
      %p55 = scmp.eq.s32.totalorder %s17, 1
      %p56 = scmp.ne.s32.totalorder %s51, %s53
      %p57 = scmp.eq.s32.totalorder %s17, 0
      %p58 = por %p56, %p57
      %p59 = scmp.ne.s32.totalorder %s51, %s53
      %p60 = scmp.eq.s32.totalorder %s22, 1
      %p61 = por %p59, %p60
      %p62 = scmp.ne.s32.totalorder %s53, %s54
      %p63 = scmp.eq.s32.totalorder %s22, 0
      %p64 = por %p62, %p63
      %p65 = scmp.ne.s32.totalorder %s53, %s54
      %p66 = scmp.eq.s32.totalorder %s23, 1
      %p67 = por %p65, %p66
      %p69 = scmp.ne.s32.totalorder %s54, %s68
      %p70 = scmp.eq.s32.totalorder %s23, 0
      %p71 = por %p69, %p70
      %s73 = sadd.s32 %s72, 1
      %p76 = scmp.eq.s32.totalorder %s17, 1
      %p77 = scmp.ne.s32.totalorder %s72, %s74
      %p78 = scmp.eq.s32.totalorder %s17, 0
      %p79 = por %p77, %p78
      %p80 = scmp.ne.s32.totalorder %s72, %s74
      %p81 = scmp.eq.s32.totalorder %s22, 1
      %p82 = por %p80, %p81
      %p83 = scmp.ne.s32.totalorder %s74, %s75
      %p84 = scmp.eq.s32.totalorder %s22, 0
      %p85 = por %p83, %p84
      %p86 = scmp.ne.s32.totalorder %s74, %s75
      %p87 = scmp.eq.s32.totalorder %s23, 1
      %p88 = por %p86, %p87
      %p90 = scmp.ne.s32.totalorder %s75, %s89
      %p91 = scmp.eq.s32.totalorder %s23, 0
      %p92 = por %p90, %p91
      %s94 = sadd.s32 %s93, 1
      %p97 = scmp.eq.s32.totalorder %s17, 1
      %p98 = scmp.ne.s32.totalorder %s93, %s95
      %p99 = scmp.eq.s32.totalorder %s17, 0
      %p100 = por %p98, %p99
      %p101 = scmp.ne.s32.totalorder %s93, %s95
      %p102 = scmp.eq.s32.totalorder %s22, 1
      %p103 = por %p101, %p102
      %p104 = scmp.ne.s32.totalorder %s95, %s96
      %p105 = scmp.eq.s32.totalorder %s22, 0
      %p106 = por %p104, %p105
      %p107 = scmp.ne.s32.totalorder %s95, %s96
      %p108 = scmp.eq.s32.totalorder %s23, 1
      %p109 = por %p107, %p108
      %p111 = scmp.ne.s32.totalorder %s96, %s110
      %p112 = scmp.eq.s32.totalorder %s23, 0
      %p113 = por %p111, %p112
      %s115 = sadd.s32 %s114, 1
      %p118 = scmp.eq.s32.totalorder %s17, 1
      %p119 = scmp.ne.s32.totalorder %s114, %s116
      %p120 = scmp.eq.s32.totalorder %s17, 0
      %p121 = por %p119, %p120
      %p122 = scmp.ne.s32.totalorder %s114, %s116
      %p123 = scmp.eq.s32.totalorder %s22, 1
      %p124 = por %p122, %p123
      %p125 = scmp.ne.s32.totalorder %s116, %s117
      %p126 = scmp.eq.s32.totalorder %s22, 0
      %p127 = por %p125, %p126
      %p128 = scmp.ne.s32.totalorder %s116, %s117
      %p129 = scmp.eq.s32.totalorder %s23, 1
      %p130 = por %p128, %p129
      %p132 = scmp.ne.s32.totalorder %s117, %s131
      %p133 = scmp.eq.s32.totalorder %s23, 0
      %p134 = por %p132, %p133
      %s135 = ssub.s32 %s17, %s24
      %p136 = scmp.eq.s32.totalorder %s135, 0
      %s138 = sadd.s32 %s137, 1
      %s139 = scalar_select %p136, %s137, %s138
      %p142 = pneg %p136
      %p143 = scmp.eq.s32.totalorder %s17, 1
      %p144 = por %p142, %p143
      %p145 = scmp.ne.s32.totalorder %s137, %s140
      %p146 = scmp.eq.s32.totalorder %s17, 0
      %p147 = por %p145, %p146
      %p148 = scmp.ne.s32.totalorder %s137, %s140
      %p149 = scmp.eq.s32.totalorder %s22, 1
      %p150 = por %p148, %p149
      %p151 = scmp.ne.s32.totalorder %s140, %s141
      %p152 = scmp.eq.s32.totalorder %s22, 0
      %p153 = por %p151, %p152
      %p154 = scmp.ne.s32.totalorder %s140, %s141
      %p155 = scmp.eq.s32.totalorder %s23, 1
      %p156 = por %p154, %p155
      %p158 = scmp.ne.s32.totalorder %s141, %s157
      %p159 = scmp.eq.s32.totalorder %s23, 0
      %p160 = por %p158, %p159
      %p161 = scmp.le.s32.totalorder 1, %s17
      %p162 = scmp.lt.s32.totalorder %s17, 3
      %p163 = pnand %p161, %p162
      %p164 = pneg %p163
      // Predicated region
      $region9: #{tpu_custom_call.1} parent=5 // pred_check
        _
      $region10: #{tpu_custom_call.1} parent=5 // pred_check_branch
        %166 = sbr.rel (%p163) target = $region12
      $region11: #{tpu_custom_call.1} parent=5 // pred_region
        %s167 = ssub.s32 %s17, 1
        // Predicated region
        $region13: #{tpu_custom_call.1} parent=11 // pred_check
          %p168 = pneg %p64
        $region14: #{tpu_custom_call.1} parent=11 // pred_check_branch
          %170 = sbr.rel (%p168) target = $region16
        $region15: #{tpu_custom_call.1} parent=11 // pred_region
          _
        $region16: #{tpu_custom_call.1} parent=11 // pred_fallthru
          _
        // Predicated region
        $region17: #{tpu_custom_call.1} parent=11 // pred_check
          %p171 = pneg %p85
        $region18: #{tpu_custom_call.1} parent=11 // pred_check_branch
          %173 = sbr.rel (%p171) target = $region20
        $region19: #{tpu_custom_call.1} parent=11 // pred_region
          _
        $region20: #{tpu_custom_call.1} parent=11 // pred_fallthru
          _
        // Predicated region
        $region21: #{tpu_custom_call.1} parent=11 // pred_check
          %p174 = pneg %p106
        $region22: #{tpu_custom_call.1} parent=11 // pred_check_branch
          %176 = sbr.rel (%p174) target = $region24
        $region23: #{tpu_custom_call.1} parent=11 // pred_region
          _
        $region24: #{tpu_custom_call.1} parent=11 // pred_fallthru
          _
        // Predicated region
        $region25: #{tpu_custom_call.1} parent=11 // pred_check
          %p177 = pneg %p127
        $region26: #{tpu_custom_call.1} parent=11 // pred_check_branch
          %179 = sbr.rel (%p177) target = $region28
        $region27: #{tpu_custom_call.1} parent=11 // pred_region
          _
        $region28: #{tpu_custom_call.1} parent=11 // pred_fallthru
          _
      $region12: #{tpu_custom_call.1} parent=5 // pred_fallthru
        _
      %p180 = scmp.lt.s32.totalorder %s17, 2
      // Predicated region
      $region29: #{tpu_custom_call.1} parent=5 // pred_check
        %p181 = pneg %p180
      $region30: #{tpu_custom_call.1} parent=5 // pred_check_branch
        %183 = sbr.rel (%p181) target = $region32
      $region31: #{tpu_custom_call.1} parent=5 // pred_region
        // Predicated region
        $region33: #{tpu_custom_call.1} parent=31 // pred_check
          %p184 = pneg %p37
        $region34: #{tpu_custom_call.1} parent=31 // pred_check_branch
          %186 = sbr.rel (%p184) target = $region36
        $region35: #{tpu_custom_call.1} parent=31 // pred_region
          %s187 = sand.u32 %s27, 1
          %s188 = scalar_lea.sflag [#allocation3], %s187
          %s189 = sand.u32 %s27, 1
          %s190 = smul.addr %s189, 64
          %s191 = scalar_lea.vmem [#allocation2], %s190
          %s193 = ssub.s32 1024, 1024
          %194 = vsyncadd %s188, %s193
          %s195 = smul.addr %s17, 8
          %s196 = smul.addr %s195, 128
          %s197 = scalar_lea.hbm %s0, %s196
          %s198 = sshll.u32 %s191, 4
          %s199 = int_to_ptr.vmem [resolvable:$true] %s198
          %204 = dma.hbm_to_vmem [thread:$0]  %s197, 1024, %s199, %s188, 256, 256, 16
        $region36: #{tpu_custom_call.1} parent=31 // pred_fallthru
          _
      $region32: #{tpu_custom_call.1} parent=5 // pred_fallthru
        _
      %p205 = scmp.le.s32.totalorder 1, %s17
      %p206 = scmp.lt.s32.totalorder %s17, 3
      %p207 = pnand %p205, %p206
      %p208 = pneg %p207
      // Predicated region
      $region37: #{tpu_custom_call.1} parent=5 // pred_check
        _
      $region38: #{tpu_custom_call.1} parent=5 // pred_check_branch
        %210 = sbr.rel (%p207) target = $region40
      $region39: #{tpu_custom_call.1} parent=5 // pred_region
        %s211 = ssub.s32 %s17, 1
        %s212 = sand.u32 %s30, 1
        %s213 = scalar_lea.sflag [#allocation3], %s212
        %s214 = sand.u32 %s30, 1
        %s215 = smul.addr %s214, 64
        %s216 = scalar_lea.vmem [#allocation2], %s215
        // Predicated region
        $region41: #{tpu_custom_call.1} parent=39 // pred_check
          %p217 = pneg %p43
        $region42: #{tpu_custom_call.1} parent=39 // pred_check_branch
          %219 = sbr.rel (%p217) target = $region44
        $region43: #{tpu_custom_call.1} parent=39 // pred_region
          %220 = dma.done %s213, 1024
        $region44: #{tpu_custom_call.1} parent=39 // pred_fallthru
          _
        %s221 = sand.u32 %s30, 1
        %s222 = scalar_lea.sflag [#allocation3], %s221
        %s223 = sand.u32 %s30, 1
        %s224 = smul.addr %s223, 64
        %s225 = scalar_lea.vmem [#allocation2], %s224
        %p226 = pneg %p43
        %p227 = pneg %p40
        %p228 = pneg %p64
        %p229 = pneg %p61
        %p230 = pneg %p85
        %p231 = pneg %p82
        %p232 = pneg %p106
        %p233 = pneg %p103
        %p234 = pneg %p127
        %p235 = pneg %p124
        %p236 = pneg %p153
        %p237 = pneg %p150
        %s238 = sand.u32 %s140, 1
        %s239 = scalar_lea.sflag [#allocation4], %s238
        %s240 = sand.u32 %s140, 1
        %s241 = smul.addr %s240, 64
        %s242 = scalar_lea.vmem [#allocation5], %s241
        %v243 = vld [vmem:[%s216] sm:$0xff]
        %v244 = vld [vmem:[%s216 + $0x8] sm:$0xff]
        %v245 = vld [vmem:[%s216 + $0x10] sm:$0xff]
        %v246 = vld [vmem:[%s216 + $0x18] sm:$0xff]
        %v247 = vld [vmem:[%s216 + $0x20] sm:$0xff]
        %v248 = vld [vmem:[%s216 + $0x28] sm:$0xff]
        %v249 = vld [vmem:[%s216 + $0x30] sm:$0xff]
        %v250 = vld [vmem:[%s216 + $0x38] sm:$0xff]
        %v251 = vadd.f32 %v243, %v244
        %252 = vadd.xlane.f32.xlu0 %v251
        %v253 = vpop.xlane.xlu0 %252
        %v254 = vadd.f32 %v245, %v246
        %255 = vadd.xlane.f32.xlu0 %v254
        %v256 = vpop.xlane.xlu0 %255
        %v257 = vadd.f32 %v247, %v248
        %258 = vadd.xlane.f32.xlu0 %v257
        %v259 = vpop.xlane.xlu0 %258
        %v260 = vadd.f32 %v249, %v250
        %261 = vadd.xlane.f32.xlu0 %v260
        %v262 = vpop.xlane.xlu0 %261
        %v263 = vmax.f32 %v243, %v244
        %264 = vmax.xlane.f32.xlu0 %v263
        %v265 = vpop.xlane.xlu0 %264
        %v266 = vmax.f32 %v245, %v246
        %267 = vmax.xlane.f32.xlu0 %v266
        %v268 = vpop.xlane.xlu0 %267
        %v269 = vmax.f32 %v247, %v248
        %270 = vmax.xlane.f32.xlu0 %v269
        %v271 = vpop.xlane.xlu0 %270
        %v272 = vmax.f32 %v249, %v250
        %273 = vmax.xlane.f32.xlu0 %v272
        %v274 = vpop.xlane.xlu0 %273
        %v275 = vmul.f32 %v253, 0.00390625
        %v276 = vmul.f32 %v256, 0.00390625
        %v277 = vmul.f32 %v259, 0.00390625
        %v278 = vmul.f32 %v262, 0.00390625
        %v283 = vlaneseq
        %v284 = vand.u32 %v283, 127
        %v285 = vlaneseq
        %v286 = vshrl.u32 %v285, 7
        %v287 = vsub.s32 %v284, %v286
        %v288 = vrot.slane %v275, %v287
        %v289 = vadd.s32 %v284, 4294967288
        %v290 = vlaneseq
        %v291 = vshrl.u32 %v290, 7
        %v292 = vsub.s32 %v289, %v291
        %v293 = vrot.slane %v276, %v292
        %vm294 = vcmask 130112
        %v295 = vsel %vm294, %v293, %v288
        %v296 = vadd.s32 %v284, 4294967280
        %v297 = vlaneseq
        %v298 = vshrl.u32 %v297, 7
        %v299 = vsub.s32 %v296, %v298
        %v300 = vrot.slane %v277, %v299
        %vm301 = vcmask 195712
        %v302 = vsel %vm301, %v300, %v295
        %v303 = vadd.s32 %v284, 4294967272
        %v304 = vlaneseq
        %v305 = vshrl.u32 %v304, 7
        %v306 = vsub.s32 %v303, %v305
        %v307 = vrot.slane %v278, %v306
        %vm308 = vcmask 261312
        %v309 = vsel %vm308, %v307, %v302
        %v315 = vlaneseq
        %v316 = vshrl.u32 %v315, 7
        %v317 = vsub.s32 %v284, %v316
        %v318 = vrot.slane %v265, %v317
        %v319 = vlaneseq
        %v320 = vshrl.u32 %v319, 7
        %v321 = vsub.s32 %v289, %v320
        %v322 = vrot.slane %v268, %v321
        %v323 = vsel %vm294, %v322, %v318
        %v324 = vlaneseq
        %v325 = vshrl.u32 %v324, 7
        %v326 = vsub.s32 %v296, %v325
        %v327 = vrot.slane %v271, %v326
        %v328 = vsel %vm301, %v327, %v323
        %v329 = vlaneseq
        %v330 = vshrl.u32 %v329, 7
        %v331 = vsub.s32 %v303, %v330
        %v332 = vrot.slane %v274, %v331
        %v333 = vsel %vm308, %v332, %v328
        %vm335 = vcmask 1040384
        %v336 = vsel %vm335, %v309, %v333
        %v337 = vld [vmem:[%s1] sm:$0xff]
        %v338 = vld [vmem:[%s1 + $0x8] sm:$0xff]
        %v339 = vld [vmem:[%s1 + $0x10] sm:$0xff]
        %v340 = vld [vmem:[%s1 + $0x18] sm:$0xff]
        %v341 = vld [vmem:[%s2] sm:$0x1]
        %v343 = vlaneseq
        %v344 = vshrl.u32 %v343, 7
        %v345 = vsub.s32 0, %v344
        %v346 = vrot.slane %v341, %v345
        %vm348 = vcmask 261120
        %v350 = vsel %vm348, %v336, 0
        %352 = vmatprep.subr.mxu0 0.0
        %353 = vmatpush1.msra.mxu0 %v337
        %354 = vmatprep.subr.mxu0 0.0
        %355 = vmatpush1.msra.mxu0 %v338
        %356 = vmatprep.subr.mxu0 0.0
        %357 = vmatpush1.msra.mxu0 %v339
        %358 = vmatprep.subr.mxu0 0.0
        %359 = vmatpush1.msra.mxu0 %v340
        %360 = vmatprep.subr.mxu0 0.0
        %361 = vmatpush1.msra.mxu0 0.0
        %362 = vmatprep.subr.mxu0 0.0
        %363 = vmatpush1.msra.mxu0 0.0
        %364 = vmatprep.subr.mxu0 0.0
        %365 = vmatpush1.msra.mxu0 0.0
        %366 = vmatprep.subr.mxu0 0.0
        %367 = vmatpush1.msra.mxu0 0.0
        %368 = vmatprep.subr.mxu0 0.0
        %369 = vmatpush1.msra.mxu0 0.0
        %370 = vmatprep.subr.mxu0 0.0
        %371 = vmatpush1.msra.mxu0 0.0
        %372 = vmatprep.subr.mxu0 0.0
        %373 = vmatpush1.msra.mxu0 0.0
        %374 = vmatprep.subr.mxu0 0.0
        %375 = vmatpush1.msra.mxu0 0.0
        %376 = vmatprep.subr.mxu0 0.0
        %377 = vmatpush1.msra.mxu0 0.0
        %378 = vmatprep.subr.mxu0 0.0
        %379 = vmatpush1.msra.mxu0 0.0
        %380 = vmatprep.subr.mxu0 0.0
        %381 = vmatpush1.msra.mxu0 0.0
        %382 = vmatprep.subr.mxu0 0.0
        %383 = vmatpush1.msra.mxu0 0.0
        %384 = vmatprep.subr.mxu0 0.0
        %385 = vmatpush1.msra.mxu0 0.0
        %386 = vmatprep.subr.mxu0 0.0
        %387 = vmatpush1.msra.mxu0 0.0
        %388 = vmatprep.subr.mxu0 0.0
        %389 = vmatpush1.msra.mxu0 0.0
        %390 = vmatprep.subr.mxu0 0.0
        %391 = vmatpush1.msra.mxu0 0.0
        %392 = vmatprep.subr.mxu0 0.0
        %393 = vmatpush1.msra.mxu0 0.0
        %394 = vmatprep.subr.mxu0 0.0
        %395 = vmatpush1.msra.mxu0 0.0
        %396 = vmatprep.subr.mxu0 0.0
        %397 = vmatpush1.msra.mxu0 0.0
        %398 = vmatprep.subr.mxu0 0.0
        %399 = vmatpush1.msra.mxu0 0.0
        %400 = vmatprep.subr.mxu0 0.0
        %401 = vmatpush1.msra.mxu0 0.0
        %402 = vmatprep.subr.mxu0 0.0
        %403 = vmatpush1.msra.mxu0 0.0
        %404 = vmatprep.subr.mxu0 0.0
        %405 = vmatpush1.msra.mxu0 0.0
        %406 = vmatprep.subr.mxu0 0.0
        %407 = vmatpush1.msra.mxu0 0.0
        %408 = vmatprep.subr.mxu0 0.0
        %409 = vmatpush1.msra.mxu0 0.0
        %410 = vmatprep.subr.mxu0 0.0
        %411 = vmatpush1.msra.mxu0 0.0
        %412 = vmatprep.subr.mxu0 0.0
        %413 = vmatpush1.msra.mxu0 0.0
        %414 = vmatprep.subr.mxu0 0.0
        %415 = vmatpush1.msra.mxu0 0.0
        %416 = vmatprep.mubr.f32.mxu0 0.0
        %417 = vmatmul.mubr.f32.gmra.mrb[0].mxu0 %v350
        %v418 = vpop.f32.mrb[0].mxu0
        %v419 = vadd.f32 %v346, %v418
        %v420 = vpop.f32.mrb[0].mxu0
        %421 = vdwg.mxu0
        %v422 = vmax.f32 %v419, 0.0
        %v423 = vld [vmem:[%s3] sm:$0xff]
        %v424 = vld [vmem:[%s4] sm:$0x1]
        %v426 = vlaneseq
        %v427 = vshrl.u32 %v426, 7
        %v428 = vsub.s32 0, %v427
        %v429 = vrot.slane %v424, %v428
        %vm431 = vcmask 64512
        %v433 = vsel %vm431, %v422, 0
        %435 = vmatprep.subr.mxu0 0.0
        %436 = vmatpush1.msra.mxu0 %v423
        %437 = vmatprep.subr.mxu0 0.0
        %438 = vmatpush1.msra.mxu0 0.0
        %439 = vmatprep.subr.mxu0 0.0
        %440 = vmatpush1.msra.mxu0 0.0
        %441 = vmatprep.subr.mxu0 0.0
        %442 = vmatpush1.msra.mxu0 0.0
        %443 = vmatprep.subr.mxu0 0.0
        %444 = vmatpush1.msra.mxu0 0.0
        %445 = vmatprep.subr.mxu0 0.0
        %446 = vmatpush1.msra.mxu0 0.0
        %447 = vmatprep.subr.mxu0 0.0
        %448 = vmatpush1.msra.mxu0 0.0
        %449 = vmatprep.subr.mxu0 0.0
        %450 = vmatpush1.msra.mxu0 0.0
        %451 = vmatprep.subr.mxu0 0.0
        %452 = vmatpush1.msra.mxu0 0.0
        %453 = vmatprep.subr.mxu0 0.0
        %454 = vmatpush1.msra.mxu0 0.0
        %455 = vmatprep.subr.mxu0 0.0
        %456 = vmatpush1.msra.mxu0 0.0
        %457 = vmatprep.subr.mxu0 0.0
        %458 = vmatpush1.msra.mxu0 0.0
        %459 = vmatprep.subr.mxu0 0.0
        %460 = vmatpush1.msra.mxu0 0.0
        %461 = vmatprep.subr.mxu0 0.0
        %462 = vmatpush1.msra.mxu0 0.0
        %463 = vmatprep.subr.mxu0 0.0
        %464 = vmatpush1.msra.mxu0 0.0
        %465 = vmatprep.subr.mxu0 0.0
        %466 = vmatpush1.msra.mxu0 0.0
        %467 = vmatprep.subr.mxu0 0.0
        %468 = vmatpush1.msra.mxu0 0.0
        %469 = vmatprep.subr.mxu0 0.0
        %470 = vmatpush1.msra.mxu0 0.0
        %471 = vmatprep.subr.mxu0 0.0
        %472 = vmatpush1.msra.mxu0 0.0
        %473 = vmatprep.subr.mxu0 0.0
        %474 = vmatpush1.msra.mxu0 0.0
        %475 = vmatprep.subr.mxu0 0.0
        %476 = vmatpush1.msra.mxu0 0.0
        %477 = vmatprep.subr.mxu0 0.0
        %478 = vmatpush1.msra.mxu0 0.0
        %479 = vmatprep.subr.mxu0 0.0
        %480 = vmatpush1.msra.mxu0 0.0
        %481 = vmatprep.subr.mxu0 0.0
        %482 = vmatpush1.msra.mxu0 0.0
        %483 = vmatprep.subr.mxu0 0.0
        %484 = vmatpush1.msra.mxu0 0.0
        %485 = vmatprep.subr.mxu0 0.0
        %486 = vmatpush1.msra.mxu0 0.0
        %487 = vmatprep.subr.mxu0 0.0
        %488 = vmatpush1.msra.mxu0 0.0
        %489 = vmatprep.subr.mxu0 0.0
        %490 = vmatpush1.msra.mxu0 0.0
        %491 = vmatprep.subr.mxu0 0.0
        %492 = vmatpush1.msra.mxu0 0.0
        %493 = vmatprep.subr.mxu0 0.0
        %494 = vmatpush1.msra.mxu0 0.0
        %495 = vmatprep.subr.mxu0 0.0
        %496 = vmatpush1.msra.mxu0 0.0
        %497 = vmatprep.subr.mxu0 0.0
        %498 = vmatpush1.msra.mxu0 0.0
        %499 = vmatprep.mubr.f32.mxu0 0.0
        %500 = vmatmul.mubr.f32.gmra.mrb[0].mxu0 %v433
        %v501 = vpop.f32.mrb[0].mxu0
        %v502 = vadd.f32 %v429, %v501
        %v503 = vpop.f32.mrb[0].mxu0
        %504 = vdwg.mxu0
        %v506 = vrot.slane %v502, 1
        %v508 = vadd.f32 %v502, %v506
        %v509 = vxor.u32 %v508, 2147483648
        %v510 = vmul.f32 %v509, 1.442695
        %v511 = vpow.pop %v510
        %v512 = vadd.f32 %v511, 1.0
        %v513 = vrcp.pop %v512
        %v514 = vmul.f32 1.0, %v513
        %v515 = vlaneseq
        %v516 = vshrl.u32 %v515, 7
        %v517 = vsub.s32 0, %v516
        %v518 = vrot.slane %v514, %v517
        %520 = vbcast.lane.b32.xlu0 %v518, 256
        %v521 = vpop.permute.xlu0 %520
        %s523 = sor.u32 256, 8
        %524 = vbcast.lane.b32.xlu0 %v518, %s523
        %v525 = vpop.permute.xlu0 %524
        %s527 = sor.u32 256, 16
        %528 = vbcast.lane.b32.xlu0 %v518, %s527
        %v529 = vpop.permute.xlu0 %528
        %s531 = sor.u32 256, 24
        %532 = vbcast.lane.b32.xlu0 %v518, %s531
        %v533 = vpop.permute.xlu0 %532
        %v534 = vmul.f32 %v243, %v521
        %v535 = vmul.f32 %v244, %v521
        %v536 = vmul.f32 %v245, %v525
        %v537 = vmul.f32 %v246, %v525
        %v538 = vmul.f32 %v247, %v529
        %v539 = vmul.f32 %v248, %v529
        %v540 = vmul.f32 %v249, %v533
        %v541 = vmul.f32 %v250, %v533
        %542 = vst [vmem:[%s242] sm:$0xff] %v534
        %543 = vst [vmem:[%s242 + $0x8] sm:$0xff] %v535
        %544 = vst [vmem:[%s242 + $0x10] sm:$0xff] %v536
        %545 = vst [vmem:[%s242 + $0x18] sm:$0xff] %v537
        %546 = vst [vmem:[%s242 + $0x20] sm:$0xff] %v538
        %547 = vst [vmem:[%s242 + $0x28] sm:$0xff] %v539
        %548 = vst [vmem:[%s242 + $0x30] sm:$0xff] %v540
        %549 = vst [vmem:[%s242 + $0x38] sm:$0xff] %v541
        %s550 = sand.u32 %s140, 1
        %s551 = scalar_lea.sflag [#allocation4], %s550
        %s552 = sand.u32 %s140, 1
        %s553 = smul.addr %s552, 64
        %s554 = scalar_lea.vmem [#allocation5], %s553
        // Predicated region
        $region45: #{tpu_custom_call.1} parent=39 // pred_check
          %p555 = pneg %p150
        $region46: #{tpu_custom_call.1} parent=39 // pred_check_branch
          %557 = sbr.rel (%p555) target = $region48
        $region47: #{tpu_custom_call.1} parent=39 // pred_region
          %s559 = ssub.s32 1024, 1024
          %560 = vsyncadd %s551, %s559
          %s561 = smul.addr %s22, 8
          %s562 = smul.addr %s561, 128
          %s563 = scalar_lea.hbm %s5, %s562
          %s564 = sshll.u32 %s554, 4
          %s565 = int_to_ptr.vmem [resolvable:$true] %s564
          %570 = dma.vmem_to_hbm [thread:$0]  %s565, 1024, %s563, %s551, 256, 256, 16
        $region48: #{tpu_custom_call.1} parent=39 // pred_fallthru
          _
      $region40: #{tpu_custom_call.1} parent=5 // pred_fallthru
        _
      %p571 = scmp.le.s32.totalorder 2, %s17
      // Predicated region
      $region49: #{tpu_custom_call.1} parent=5 // pred_check
        %p572 = pneg %p571
      $region50: #{tpu_custom_call.1} parent=5 // pred_check_branch
        %574 = sbr.rel (%p572) target = $region52
      $region51: #{tpu_custom_call.1} parent=5 // pred_region
        %s575 = ssub.s32 %s17, 2
        // Predicated region
        $region53: #{tpu_custom_call.1} parent=51 // pred_check
          %p576 = pneg %p156
        $region54: #{tpu_custom_call.1} parent=51 // pred_check_branch
          %578 = sbr.rel (%p576) target = $region56
        $region55: #{tpu_custom_call.1} parent=51 // pred_region
          %s579 = sand.u32 %s141, 1
          %s580 = scalar_lea.sflag [#allocation4], %s579
          %s581 = sand.u32 %s141, 1
          %s582 = smul.addr %s581, 64
          %s583 = scalar_lea.vmem [#allocation5], %s582
          %584 = dma.done %s580, 1024
        $region56: #{tpu_custom_call.1} parent=51 // pred_fallthru
          _
      $region52: #{tpu_custom_call.1} parent=5 // pred_fallthru
        _
    $region6: #{tpu_custom_call.1} parent=1 // loop_footer
      %s21 = sadd.s32 1, %s17
    $region7: #{tpu_custom_call.1} parent=1 // loop_footer_branch
      %16 = sbr.rel target = $region3
    $region8: #{tpu_custom_call.1} parent=1 // loop_exit
      _
    %585 = vsyncpa [#allocation3], 1
    %s586 = scalar_lea.sflag [#allocation3], 1
    %587 = vsyncpa %s586, 1
    %588 = vsyncpa [#allocation4], 1
    %s589 = scalar_lea.sflag [#allocation4], 1
    %590 = vsyncpa %s589, 1

</llo_original>
